<compile_context>
chip_gen: v5e
topology: v5e:2x2
jax: 0.10.0
libtpu: 0.0.40
codegen_flags: <defaults>
</compile_context>

<pallas_src>
import jax
import jax.numpy as jnp
from jax.experimental import pallas as pl
from jax.experimental.pallas import tpu as pltpu

_TARGET_BLOCK_BYTES = 4 * 1024 * 1024   # ~4 MiB per block per buffer
_MAX_LANE = 2048                        # lane-dense cap (multiple of 128)
_MAX_FULLDIM_LANE = 8192                # cap for the full-last-dim fallback
_VMEM_LIMIT_BYTES = 32 << 20            # safe on v5e/v6e/v7x


def _sign11_kernel(z_ref, h_ref):
    z = z_ref[...]
    one = jnp.ones((), dtype=z.dtype)
    # NaN compares false -> maps to -1, matching jnp.where(z >= 0, 1, -1).
    # (For unsigned dtypes z >= 0 is always true, so the -one branch is never
    #  selected and wraparound is irrelevant.)
    h_ref[...] = jnp.where(z >= 0, one, -one)


def _sublane_pack(itemsize: int) -> int:
    # Rows per packed native tile: f32 -> 8, bf16/f16 -> 16, int8/fp8 -> 32.
    return {4: 8, 2: 16, 1: 32}.get(itemsize, 8)


def _pick_lane(n: int):
    """Largest multiple of 128 (<= _MAX_LANE) dividing n, preferring rows >= 8."""
    best = None
    for m in range(_MAX_LANE // 128, 0, -1):
        lane = 128 * m
        if n % lane == 0:
            if best is None:
                best = lane
            if n // lane >= 8:
                return lane
    return best


def _pick_fulldim_lane(n: int):
    """Largest divisor of n in [128, _MAX_FULLDIM_LANE], or None."""
    for lane in range(min(_MAX_FULLDIM_LANE, n), 127, -1):
        if n % lane == 0:
            return lane
    return None


def _pick_block_rows(rows: int, lane: int, itemsize: int) -> int:
    pack = _sublane_pack(itemsize)
    if rows <= pack:
        return rows  # equals the full (second-to-last) dim -> exempt from /pack rule
    # Largest multiple of `pack` fitting the target block size.
    fit = max(pack, (_TARGET_BLOCK_BYTES // (lane * itemsize)) // pack * pack)
    # Aim for >= 2 grid steps so both v7x TensorCores get work.
    half = ((rows + 1) // 2 + pack - 1) // pack * pack
    return max(pack, min(fit, half))


def _run_sign11_2d(z2d: jax.Array, block_rows: int, donate: bool) -> jax.Array:
    rows, lane = z2d.shape
    itemsize = jnp.dtype(z2d.dtype).itemsize
    nbytes = rows * lane * itemsize
    kwargs = {}
    if donate:
        kwargs["input_output_aliases"] = {0: 0}
    return pl.pallas_call(
        _sign11_kernel,
        out_shape=jax.ShapeDtypeStruct((rows, lane), z2d.dtype),
        grid=(pl.cdiv(rows, block_rows),),
        in_specs=[pl.BlockSpec((block_rows, lane), lambda i: (i, 0))],
        out_specs=pl.BlockSpec((block_rows, lane), lambda i: (i, 0)),
        compiler_params=pltpu.CompilerParams(
            dimension_semantics=("parallel",),
            vmem_limit_bytes=_VMEM_LIMIT_BYTES,
        ),
        cost_estimate=pl.CostEstimate(
            flops=rows * lane, transcendentals=0, bytes_accessed=2 * nbytes),
        **kwargs,
    )(z2d)


def sign11(z: jax.Array, donate: bool = False) -> jax.Array:
    """Elementwise {-1,+1} sign activation computed in a Pallas TPU kernel.

    Accepts any shape (e.g. NCHW). Returns an array of the same shape/dtype.
    Set donate=True only if the caller no longer needs `z` (and donates it at
    the jit boundary) so the output can alias the input HBM buffer.
    """
    orig_shape = z.shape
    dtype = z.dtype
    n = int(z.size)
    if n == 0:
        return z
    itemsize = jnp.dtype(dtype).itemsize

    flat = z.reshape(-1)  # metadata-only for contiguous inputs

    lane = _pick_lane(n)
    if lane is not None:
        # Zero-copy lane-dense path: no pad, no slice.
        rows = n // lane
        block_rows = _pick_block_rows(rows, lane, itemsize)
        out = _run_sign11_2d(flat.reshape(rows, lane), block_rows, donate)
        return out.reshape(orig_shape)

    lane = _pick_fulldim_lane(n)
    if lane is not None:
        # Zero-copy fallback: lane is the full last dim (exempt from the /128
        # rule); only per-row tail stores are masked.
        rows = n // lane
        block_rows = _pick_block_rows(rows, lane, itemsize)
        out = _run_sign11_2d(flat.reshape(rows, lane), block_rows, donate)
        return out.reshape(orig_shape)

    # Last resort (e.g. prime-sized inputs with no usable divisor): pad the
    # flat array to a multiple of 128 and slice afterwards. This adds extra
    # HBM passes, but only triggers when no zero-copy 2D view exists.
    lane = 128
    rows = pl.cdiv(n, lane)
    flat = jnp.pad(flat, (0, rows * lane - n))
    block_rows = _pick_block_rows(rows, lane, itemsize)
    out = _run_sign11_2d(flat.reshape(rows, lane), block_rows, False)
    return out.reshape(-1)[:n].reshape(orig_shape)


if __name__ == "__main__":
    key = jax.random.PRNGKey(0)

    # Small NCHW input consistent with a conv-style activation.
    x = jax.random.normal(key, (2, 4, 16, 16), dtype=jnp.float32)
    h = jax.block_until_ready(sign11(x))
    ref = jnp.where(x >= 0, 1.0, -1.0).astype(x.dtype)
    assert h.shape == x.shape and h.dtype == x.dtype
    assert bool(jnp.all(h == ref))

    # Non-128-aligned shape: exercises the zero-copy full-last-dim path.
    x2 = jax.random.normal(jax.random.PRNGKey(1), (3, 7, 29, 53), dtype=jnp.float32)
    h2 = jax.block_until_ready(sign11(x2))
    ref2 = jnp.where(x2 >= 0, 1.0, -1.0).astype(x2.dtype)
    assert h2.shape == x2.shape and bool(jnp.all(h2 == ref2))

    # Prime-sized 1-D input: exercises the pad+slice last-resort path.
    x3 = jax.random.normal(jax.random.PRNGKey(2), (9973,), dtype=jnp.float32)
    h3 = jax.block_until_ready(sign11(x3))
    ref3 = jnp.where(x3 >= 0, 1.0, -1.0).astype(x3.dtype)
    assert h3.shape == x3.shape and bool(jnp.all(h3 == ref3))

    # bf16 input: exercises the dtype-aware (16,128) packing rounding.
    x4 = jax.random.normal(jax.random.PRNGKey(3), (4, 8, 128), dtype=jnp.bfloat16)
    h4 = jax.block_until_ready(sign11(x4))
    ref4 = jnp.where(x4 >= 0, jnp.bfloat16(1), jnp.bfloat16(-1))
    assert h4.shape == x4.shape and h4.dtype == x4.dtype and bool(jnp.all(h4 == ref4))

    # TODO(synk): the targetprop backward rules (SoftHinge/SSTE) are training-only
    # custom gradients and are not part of this forward kernel.
    print("KERNEL_OK")
</pallas_src>

<mosaic_0001>
module attributes {stable_mosaic.version = 11 : i64} {
  func.func @_sign11_kernel(%arg0: i32, %arg1: memref<8x256xf32, #tpu.memory_space<vmem>>, %arg2: memref<8x256xf32, #tpu.memory_space<vmem>>) attributes {dimension_semantics = [#tpu.dimension_semantics<parallel>], iteration_bounds = array<i64: 1>, scalar_prefetch = 0 : i64, scratch_operands = 0 : i64, tpu.core_type = #tpu.core_type<tc>, window_params = [{transform_indices = @transform_0, window_bounds = array<i64: 8, 256>}, {transform_indices = @transform_1, window_bounds = array<i64: 8, 256>}]} {
    %c0 = arith.constant 0 : index
    %c0_0 = arith.constant 0 : index
    %0 = vector.load %arg1[%c0, %c0_0] : memref<8x256xf32, #tpu.memory_space<vmem>>, vector<8x256xf32>
    %cst = arith.constant 0.000000e+00 : f32
    %1 = vector.broadcast %cst : f32 to vector<8x256xf32>
    %2 = arith.cmpf oge, %0, %1 : vector<8x256xf32>
    %cst_1 = arith.constant 0.000000e+00 : f32
    %cst_2 = arith.constant 1.000000e+00 : f32
    %3 = arith.subf %cst_1, %cst_2 : f32
    %cst_3 = arith.constant 1.000000e+00 : f32
    %4 = vector.broadcast %cst_3 : f32 to vector<8x256xf32>
    %5 = vector.broadcast %3 : f32 to vector<8x256xf32>
    %6 = arith.select %2, %4, %5 : vector<8x256xi1>, vector<8x256xf32>
    %c0_4 = arith.constant 0 : index
    %c0_5 = arith.constant 0 : index
    %7 = vector.load %arg2[%c0_4, %c0_5] : memref<8x256xf32, #tpu.memory_space<vmem>>, vector<8x256xf32>
    tpu.vector_store %arg2[%c0_4, %c0_5], %6 {strides = array<i32>} : memref<8x256xf32, #tpu.memory_space<vmem>>, vector<8x256xf32>,
    return
  }
  func.func @transform_0(%arg0: i32) -> (i32, i32) {
    %c0_i32 = arith.constant 0 : i32
    %c0_i32_0 = arith.constant 0 : i32
    return %arg0, %c0_i32 : i32, i32
  }
  func.func @transform_1(%arg0: i32) -> (i32, i32) {
    %c0_i32 = arith.constant 0 : i32
    %c0_i32_0 = arith.constant 0 : i32
    return %arg0, %c0_i32 : i32, i32
  }
}

</mosaic_0001>

<llo_original>
// kernel: tpu_custom_call.1
$region0: #{tpu_custom_call.1}
  #allocation0 [shape = 'u32[]', space=smem, size = 0x4, offset = 0x4, fixed_abs, tag = 'smem constant byte address 0x4 - core index']
  #allocation1 [shape = 'u32[72,128]{1,0:T(1,128)}', space=vmem, size = 0x9000, scoped, tag = 'internal scratch']
  %s0 = inlined_call_operand.hbm [shape: f32[8,256], index: 0, kind: input, shape index: {}]
  %s1 = inlined_call_operand.hbm [shape: f32[8,256], index: 1, kind: output, shape index: {}]
  %s2 = sld [smem:[#allocation0]]
  $region18: #{tpu_custom_call.1} parent=0
    _
  %s4 = ssub.s32 1, %s2
  %s5 = scalar_select 0, %s4, %s2
  $region1: #{tpu_custom_call.1} parent=0
    #allocation2 [shape = 'u8[8192]{0}', space=vmem, size = 0x2000, scoped, tag = 'input window, operand 0, single buffered']
    #allocation3 [shape = 's32[1]{0}', space=sflag, size = 0x4, scoped, tag = 'scoped memory for tpu_custom_call.1']
    #allocation4 [shape = 's32[1]{0}', space=sflag, size = 0x4, scoped, tag = 'scoped memory for tpu_custom_call.1']
    #allocation5 [shape = 'u8[8192]{0}', space=vmem, size = 0x2000, scoped, tag = 'output window, operand 0, single buffered']
    %6 = vsyncpa [#allocation3], 0
    %7 = vsyncpa [#allocation4], 0
    // Predicated region
    $region2: #{tpu_custom_call.1} parent=1 // pred_check
      _
    $region3: #{tpu_custom_call.1} parent=1 // pred_check_branch
      %9 = sbr.rel (0) target = $region5
    $region4: #{tpu_custom_call.1} parent=1 // pred_region
      %11 = vsyncadd [#allocation3], 0
      %s13 = sshll.u32 %s0, 4
      %s14 = int_to_ptr.hbm [resolvable:$true] %s13
      %s15 = sshll.u32 [#allocation2], 4
      %s16 = int_to_ptr.vmem [resolvable:$true] %s15
      %18 = dma.hbm_to_vmem [thread:$0]  %s14, 256, %s16, [#allocation3]
    $region5: #{tpu_custom_call.1} parent=1 // pred_fallthru
      _
    // Predicated region
    $region6: #{tpu_custom_call.1} parent=1 // pred_check
      _
    $region7: #{tpu_custom_call.1} parent=1 // pred_check_branch
      %20 = sbr.rel (0) target = $region9
    $region8: #{tpu_custom_call.1} parent=1 // pred_region
      %22 = dma.done [#allocation3], 256
    $region9: #{tpu_custom_call.1} parent=1 // pred_fallthru
      _
    %v23 = vld [vmem:[#allocation2] sm:$0xff]
    %v24 = vld [vmem:[#allocation2 + $0x8] sm:$0xff]
    %vm25 = vcmp.ge.f32.partialorder %v23, 0.0
    %vm26 = vcmp.ge.f32.partialorder %v24, 0.0
    %v27 = vsel %vm25, 1.0, -1.0
    %v28 = vsel %vm26, 1.0, -1.0
    %29 = vst [vmem:[#allocation5] sm:$0xff] %v27
    %30 = vst [vmem:[#allocation5 + $0x8] sm:$0xff] %v28
    // Predicated region
    $region10: #{tpu_custom_call.1} parent=1 // pred_check
      _
    $region11: #{tpu_custom_call.1} parent=1 // pred_check_branch
      %32 = sbr.rel (0) target = $region13
    $region12: #{tpu_custom_call.1} parent=1 // pred_region
      %34 = vsyncadd [#allocation4], 0
      %s36 = sshll.u32 [#allocation5], 4
      %s37 = int_to_ptr.vmem [resolvable:$true] %s36
      %s38 = sshll.u32 %s1, 4
      %s39 = int_to_ptr.hbm [resolvable:$true] %s38
      %41 = dma.vmem_to_hbm [thread:$0]  %s37, 256, %s39, [#allocation4]
    $region13: #{tpu_custom_call.1} parent=1 // pred_fallthru
      _
    // Predicated region
    $region14: #{tpu_custom_call.1} parent=1 // pred_check
      _
    $region15: #{tpu_custom_call.1} parent=1 // pred_check_branch
      %43 = sbr.rel (0) target = $region17
    $region16: #{tpu_custom_call.1} parent=1 // pred_region
      %45 = dma.done [#allocation4], 256
    $region17: #{tpu_custom_call.1} parent=1 // pred_fallthru
      _
    %46 = vsyncpa [#allocation3], 1
    %47 = vsyncpa [#allocation4], 1

</llo_original>
